<compile_context>
chip_gen: v7x
topology: tpu7x:2x2x1
jax: 0.10.0
libtpu: 0.0.40
codegen_flags: <defaults>
</compile_context>

<pallas_src>
import jax
import jax.numpy as jnp
from jax.experimental import pallas as pl
from jax.experimental.pallas import tpu as pltpu


_TARGET_BLOCK_BYTES = 4 * 1024 * 1024   # ~4 MiB per block
_LANE = 128


def _sublane_align(dtype):
    """Sublane packing for the dtype: 8 for 32-bit, 16 for bf16, 32 for int8/fp8."""
    return max(8, 32 // jnp.dtype(dtype).itemsize)


def _round_up(x, m):
    return ((x + m - 1) // m) * m


def _choose_lane_tile(lanes, max_tl, row_tile, itemsize):
    """Largest 128-multiple divisor of `lanes` that is <= max_tl.

    Prefers a divisor that yields an EVEN number of lane blocks (so v7x's two
    TensorCores each get a balanced share) as long as each block stays
    >= ~512 KiB; otherwise the largest divisor wins (fewer, bigger steps).
    """
    m = lanes // _LANE
    max_d = max(1, min(m, max_tl // _LANE))
    best_any = None
    best_even = None
    for d in range(max_d, 0, -1):
        if m % d == 0:
            if best_any is None:
                best_any = d
            if best_even is None and (m // d) % 2 == 0:
                best_even = d
            if best_any is not None and best_even is not None:
                break
    d = best_any if best_any is not None else 1
    if (best_even is not None and best_even != best_any
            and row_tile * _LANE * best_even * itemsize >= (512 << 10)):
        d = best_even
    return _LANE * d


def _norm_kernel(img_ref, scale_ref, bias_ref, out_ref):
    # Fused per-row scale/bias: out = img * (1/std) + (-mean/std).
    # scale/bias blocks are (TR, 1) f32 and broadcast across the lane dim.
    x = img_ref[...].astype(jnp.float32)
    out_ref[...] = (x * scale_ref[...] + bias_ref[...]).astype(out_ref.dtype)


def normalization_forward(img, mean, std):
    """(img - mean[:,None,None]) / std[:,None,None] for an NCHW image.

    TODO(synk): the highest-level win is folding this affine map into the
    first conv that consumes the image (scale its input-channel weights by
    1/std and fold -W.mean/std into its bias) instead of a standalone HBM
    round trip; that is a call-site / model-level change.
    """
    N, C, H, W = img.shape
    assert mean.shape == (C,) and std.shape == (C,)

    R, L = N * C, H * W
    itemsize = jnp.dtype(img.dtype).itemsize
    align = _sublane_align(img.dtype)

    # Per-row FMA coefficients (tiny, computed once in XLA), kept in f32.
    scale = (1.0 / std.astype(jnp.float32))
    bias = (-mean.astype(jnp.float32)) * scale
    scale_rows = jnp.tile(scale, N).reshape(R, 1)   # row r -> channel r % C
    bias_rows = jnp.tile(bias, N).reshape(R, 1)

    # Lane-dense 2-D slab (free metadata reshape for contiguous NCHW).
    img2 = img.reshape(R, L)

    # Pad the lane axis up to a multiple of 128 so every block is a legal,
    # unmasked full-lane tile (no (1, L) full-extent fallback).
    L_pad = _round_up(L, _LANE)
    if L_pad != L:
        img2 = jnp.pad(img2, ((0, 0), (0, L_pad - L)))

    target_elems = max(_LANE, _TARGET_BLOCK_BYTES // itemsize)

    # --- row tiling: full rows whenever they fit the budget -----------------
    if R <= align or R * _LANE * itemsize <= _TARGET_BLOCK_BYTES:
        tr = R                                   # full-row blocks: always legal
    else:
        # R is large: tile rows, but only with a sublane-pack-aligned divisor.
        tr = None
        max_tr = max(align, ((target_elems // _LANE) // align) * align)
        t = min((R // align) * align, max_tr)
        while t >= align:
            if R % t == 0:
                tr = t
                break
            t -= align
        if tr is None:
            # TODO(synk): a huge R that is not divisible by the sublane pack
            # would need masked edge row-blocks; keep full rows (legal).
            tr = R

    # --- lane tiling: largest 128-multiple divisor under the byte budget ----
    max_tl = max(_LANE, (max(1, target_elems // tr) // _LANE) * _LANE)
    tl = _choose_lane_tile(L_pad, max_tl, tr, itemsize)

    grid = (R // tr, L_pad // tl)

    cost = pl.CostEstimate(
        flops=2 * R * L_pad,                      # one mul + one add per element
        transcendentals=0,
        bytes_accessed=2 * R * L_pad * itemsize
        + (scale_rows.size + bias_rows.size) * 4,
    )

    out2 = pl.pallas_call(
        _norm_kernel,
        out_shape=jax.ShapeDtypeStruct((R, L_pad), img.dtype),
        grid=grid,
        in_specs=[
            pl.BlockSpec((tr, tl), lambda i, j: (i, j)),   # image tile
            pl.BlockSpec((tr, 1), lambda i, j: (i, 0)),    # per-row 1/std
            pl.BlockSpec((tr, 1), lambda i, j: (i, 0)),    # per-row -mean/std
        ],
        out_specs=pl.BlockSpec((tr, tl), lambda i, j: (i, j)),
        compiler_params=pltpu.CompilerParams(
            dimension_semantics=("parallel", "parallel"),
            vmem_limit_bytes=32 * 1024 * 1024,
        ),
        cost_estimate=cost,
    )(img2, scale_rows, bias_rows)

    if L_pad != L:
        out2 = out2[:, :L]
    return out2.reshape(N, C, H, W)


if __name__ == "__main__":
    # Deterministic parameters (the module's default __init__ args).
    mean = jnp.array([0.485, 0.456, 0.406], dtype=jnp.float32)
    std = jnp.array([0.229, 0.224, 0.225], dtype=jnp.float32)

    # Small NCHW input consistent with the forward (3 channels to match mean/std).
    key = jax.random.PRNGKey(0)
    img = jax.random.uniform(key, (2, 3, 16, 16), dtype=jnp.float32)

    out = normalization_forward(img, mean, std)
    out = jax.block_until_ready(out)

    # Reference check in plain JAX (matches PyTorch broadcasting of (-1,1,1)).
    expected = (img - mean[None, :, None, None]) / std[None, :, None, None]
    assert out.shape == img.shape and out.dtype == img.dtype
    # scale/bias folding differs from (x-mean)/std by at most a few f32 ulps.
    assert jnp.allclose(out, expected, atol=1e-5, rtol=1e-5)

    print("KERNEL_OK")
</pallas_src>

<mosaic_0001>
module attributes {stable_mosaic.version = 11 : i64} {
  func.func @_norm_kernel(%arg0: i32, %arg1: i32, %arg2: memref<6x256xf32, #tpu.memory_space<vmem>>, %arg3: memref<6x1xf32, #tpu.memory_space<vmem>>, %arg4: memref<6x1xf32, #tpu.memory_space<vmem>>, %arg5: memref<6x256xf32, #tpu.memory_space<vmem>>) attributes {dimension_semantics = [#tpu.dimension_semantics<parallel>, #tpu.dimension_semantics<parallel>], iteration_bounds = array<i64: 1, 1>, scalar_prefetch = 0 : i64, scratch_operands = 0 : i64, tpu.core_type = #tpu.core_type<tc>, window_params = [{transform_indices = @transform_0, window_bounds = array<i64: 6, 256>}, {transform_indices = @transform_1, window_bounds = array<i64: 6, 1>}, {transform_indices = @transform_2, window_bounds = array<i64: 6, 1>}, {transform_indices = @transform_3, window_bounds = array<i64: 6, 256>}]} {
    %c0 = arith.constant 0 : index
    %c0_0 = arith.constant 0 : index
    %0 = vector.load %arg2[%c0, %c0_0] : memref<6x256xf32, #tpu.memory_space<vmem>>, vector<6x256xf32>
    %c0_1 = arith.constant 0 : index
    %c0_2 = arith.constant 0 : index
    %1 = vector.load %arg3[%c0_1, %c0_2] : memref<6x1xf32, #tpu.memory_space<vmem>>, vector<6x1xf32>
    %2 = vector.broadcast %1 : vector<6x1xf32> to vector<6x256xf32>
    %3 = arith.mulf %0, %2 : vector<6x256xf32>
    %c0_3 = arith.constant 0 : index
    %c0_4 = arith.constant 0 : index
    %4 = vector.load %arg4[%c0_3, %c0_4] : memref<6x1xf32, #tpu.memory_space<vmem>>, vector<6x1xf32>
    %5 = vector.broadcast %4 : vector<6x1xf32> to vector<6x256xf32>
    %6 = arith.addf %3, %5 : vector<6x256xf32>
    %c0_5 = arith.constant 0 : index
    %c0_6 = arith.constant 0 : index
    %7 = vector.load %arg5[%c0_5, %c0_6] : memref<6x256xf32, #tpu.memory_space<vmem>>, vector<6x256xf32>
    tpu.vector_store %arg5[%c0_5, %c0_6], %6 {strides = array<i32>} : memref<6x256xf32, #tpu.memory_space<vmem>>, vector<6x256xf32>,
    return
  }
  func.func @transform_0(%arg0: i32, %arg1: i32) -> (i32, i32) {
    %c0_i32 = arith.constant 0 : i32
    return %arg0, %arg1 : i32, i32
  }
  func.func @transform_1(%arg0: i32, %arg1: i32) -> (i32, i32) {
    %c0_i32 = arith.constant 0 : i32
    %c0_i32_0 = arith.constant 0 : i32
    return %arg0, %c0_i32 : i32, i32
  }
  func.func @transform_2(%arg0: i32, %arg1: i32) -> (i32, i32) {
    %c0_i32 = arith.constant 0 : i32
    %c0_i32_0 = arith.constant 0 : i32
    return %arg0, %c0_i32 : i32, i32
  }
  func.func @transform_3(%arg0: i32, %arg1: i32) -> (i32, i32) {
    %c0_i32 = arith.constant 0 : i32
    return %arg0, %arg1 : i32, i32
  }
}

</mosaic_0001>

<llo_original>
// kernel: tpu_custom_call.1
$region0: #{tpu_custom_call.1}
  #allocation0 [shape = 'u32[]', space=smem, size = 0x4, offset = 0x4, fixed_abs, tag = 'smem constant byte address 0x4 - core index']
  #allocation1 [shape = 'u32[144,128]{1,0:T(1,128)}', space=vmem, size = 0x12000, scoped, tag = 'internal scratch']
  %s0 = inlined_call_operand.vmem [shape: f32[6,256], index: 0, kind: input, shape index: {}]
  %s1 = inlined_call_operand.vmem [shape: f32[6,1], index: 1, kind: input, shape index: {}]
  %s2 = inlined_call_operand.vmem [shape: f32[6,1], index: 2, kind: input, shape index: {}]
  %s3 = inlined_call_operand.hbm [shape: f32[6,256], index: 3, kind: output, shape index: {}]
  %s4 = sld [smem:[#allocation0]]
  $region22: #{tpu_custom_call.1} parent=0
    _
  %s6 = ssub.s32 1, %s4
  %s7 = scalar_select 0, %s6, %s4
  $region1: #{tpu_custom_call.1} parent=0
    #allocation2 [shape = 'u8[8192]{0}', space=vmem, size = 0x2000, scoped, tag = 'output window, operand 0, single buffered']
    #allocation3 [shape = 's32[1]{0}', space=sflag, size = 0x4, scoped, tag = 'scoped memory for tpu_custom_call.1']
    %8 = vsyncpa [#allocation3], 0
    // Predicated region
    $region2: #{tpu_custom_call.1} parent=1 // pred_check
      _
    $region3: #{tpu_custom_call.1} parent=1 // pred_check_branch
      %10 = sbr.rel (0) target = $region5
    $region4: #{tpu_custom_call.1} parent=1 // pred_region
      _
    $region5: #{tpu_custom_call.1} parent=1 // pred_fallthru
      _
    // Predicated region
    $region6: #{tpu_custom_call.1} parent=1 // pred_check
      _
    $region7: #{tpu_custom_call.1} parent=1 // pred_check_branch
      %12 = sbr.rel (0) target = $region9
    $region8: #{tpu_custom_call.1} parent=1 // pred_region
      _
    $region9: #{tpu_custom_call.1} parent=1 // pred_fallthru
      _
    // Predicated region
    $region10: #{tpu_custom_call.1} parent=1 // pred_check
      _
    $region11: #{tpu_custom_call.1} parent=1 // pred_check_branch
      %14 = sbr.rel (0) target = $region13
    $region12: #{tpu_custom_call.1} parent=1 // pred_region
      _
    $region13: #{tpu_custom_call.1} parent=1 // pred_fallthru
      _
    %v15 = vld [vmem:[%s0] sm:$0x3f]
    %v16 = vld [vmem:[%s0 + $0x8] sm:$0x3f]
    %v17 = vld [vmem:[%s1] sm:$0x3f]
    %19 = vset.pattern.permute.xlu0 0
    %20 = vperm.xlu0 %19, %v17
    %v21 = vpop.permute.xlu0 %20
    %v23 = vmul.f32 %v15, %v21
    %v24 = vmul.f32 %v16, %v21
    %v25 = vld [vmem:[%s2] sm:$0x3f]
    %27 = vset.pattern.permute.xlu0 0
    %28 = vperm.xlu0 %27, %v25
    %v29 = vpop.permute.xlu0 %28
    %v31 = vadd.f32 %v23, %v29
    %v32 = vadd.f32 %v24, %v29
    %33 = vst [vmem:[#allocation2] sm:$0x3f] %v31
    %34 = vst [vmem:[#allocation2 + $0x8] sm:$0x3f] %v32
    // Predicated region
    $region14: #{tpu_custom_call.1} parent=1 // pred_check
      _
    $region15: #{tpu_custom_call.1} parent=1 // pred_check_branch
      %36 = sbr.rel (0) target = $region17
    $region16: #{tpu_custom_call.1} parent=1 // pred_region
      %s38 = ssub.s32 256, 256
      %39 = vsyncadd [#allocation3], %s38
      %s41 = sshll.u32 [#allocation2], 4
      %s42 = int_to_ptr.vmem [resolvable:$true] %s41
      %44 = dma.vmem_to_hbm [thread:$0]  %s42, 256, %s3, [#allocation3]
    $region17: #{tpu_custom_call.1} parent=1 // pred_fallthru
      _
    // Predicated region
    $region18: #{tpu_custom_call.1} parent=1 // pred_check
      _
    $region19: #{tpu_custom_call.1} parent=1 // pred_check_branch
      %46 = sbr.rel (0) target = $region21
    $region20: #{tpu_custom_call.1} parent=1 // pred_region
      %47 = dma.done [#allocation3], 256
    $region21: #{tpu_custom_call.1} parent=1 // pred_fallthru
      _
    %48 = vsyncpa [#allocation3], 1

</llo_original>
